<compile_context>
chip_gen: v5e
topology: v5e:2x2
jax: 0.10.0
libtpu: 0.0.40
codegen_flags: <defaults>
</compile_context>

<pallas_src>
import functools

import jax
import jax.numpy as jnp
from jax.experimental import pallas as pl
from jax.experimental.pallas import tpu as pltpu

LANES = 128
NEG_BIG = -1e30  # finite "minus infinity" padding value (avoids inf*0 NaNs)


def _focal_loss_kernel(x_ref, t_ref, out_ref,
                       m_ref, l_ref, dot_ref, tsum_ref,
                       *, n_valid, block_rows, alpha, gamma):
    step = pl.program_id(0)
    last = pl.num_programs(0) - 1

    # ---- init per-lane accumulators on the first grid step -----------------
    @pl.when(step == 0)
    def _():
        m_ref[...] = jnp.full((1, LANES), NEG_BIG, jnp.float32)  # per-lane running max
        l_ref[...] = jnp.zeros((1, LANES), jnp.float32)          # per-lane running sum(exp)
        dot_ref[...] = jnp.zeros((1, LANES), jnp.float32)        # per-lane sum(t * x)
        tsum_ref[...] = jnp.zeros((1, LANES), jnp.float32)       # per-lane sum(t)

    x = x_ref[...].astype(jnp.float32)   # (block_rows, LANES)
    t = t_ref[...].astype(jnp.float32)

    def accumulate(xm, tm):
        # Per-lane online logsumexp: sublane-axis reductions only (no cross-lane
        # work in the hot loop).
        m_prev = m_ref[...]                                              # (1, LANES)
        m_new = jnp.maximum(m_prev, jnp.max(xm, axis=0, keepdims=True))
        scale = jnp.exp(m_prev - m_new)
        l_ref[...] = l_ref[...] * scale + jnp.sum(jnp.exp(xm - m_new),
                                                  axis=0, keepdims=True)
        dot_ref[...] = dot_ref[...] + jnp.sum(tm * xm, axis=0, keepdims=True)
        tsum_ref[...] = tsum_ref[...] + jnp.sum(tm, axis=0, keepdims=True)
        m_ref[...] = m_new

    # All blocks except the last are guaranteed fully valid: no masking at all.
    @pl.when(step != last)
    def _():
        accumulate(x, t)

    # Only the last block can be ragged (LANES padding and/or partial rows).
    @pl.when(step == last)
    def _():
        row = jax.lax.broadcasted_iota(jnp.int32, x.shape, 0)
        col = jax.lax.broadcasted_iota(jnp.int32, x.shape, 1)
        flat = (step * block_rows + row) * LANES + col
        valid = flat < n_valid
        accumulate(jnp.where(valid, x, NEG_BIG), jnp.where(valid, t, 0.0))

        # ---- finalize: single cross-lane merge + focal transform ------------
        m = m_ref[...]                                         # (1, LANES)
        gmax = jnp.max(m, axis=-1, keepdims=True)              # (1, 1)
        # Lanes that never saw valid data have m = NEG_BIG; exp(m - gmax)
        # underflows to exactly 0, so their (garbage) l contributes nothing.
        gsum = jnp.sum(l_ref[...] * jnp.exp(m - gmax), axis=-1, keepdims=True)
        lse = gmax + jnp.log(gsum)                             # logsumexp(x)
        ce = (lse * jnp.sum(tsum_ref[...], axis=-1, keepdims=True)
              - jnp.sum(dot_ref[...], axis=-1, keepdims=True))  # -sum(t*log_softmax(x))
        p = jnp.exp(-ce)
        out_ref[...] = (alpha * (1.0 - p) ** gamma * ce).astype(out_ref.dtype)


def focal_loss(inputs, targets, *, alpha=0.25, gamma=2, reduction="mean",
               block_rows=1024):
    """Pallas implementation of FocalLoss.forward.  Returns a scalar f32."""
    x = inputs.reshape(-1)
    t = targets.reshape(-1)
    n = x.shape[0]
    if n == 0:
        # Degenerate input: the torch op is undefined here; avoid -inf*0 NaN path.
        return jnp.float32(jnp.nan)

    # Lane-dense (rows, 128) layout.  Pad only to a LANES multiple (never to a
    # block multiple) -- the in-kernel mask handles the ragged last block, so
    # inputs with n % 128 == 0 avoid any extra HBM pad/cast copies entirely.
    rem = n % LANES
    if rem:
        x = jnp.pad(x, (0, LANES - rem))
        t = jnp.pad(t, (0, LANES - rem))
    rows = (n + LANES - 1) // LANES
    x2 = x.reshape(rows, LANES)   # native dtype; cast happens inside the kernel
    t2 = t.reshape(rows, LANES)

    # Tile choice: (1024, 128) f32 is 512 KiB/input -> 2 MiB double-buffered,
    # comfortably inside the scoped VMEM default on v5e/v6e/v7x while
    # amortizing per-grid-step overhead.
    if rows <= block_rows:
        br = rows                             # single block == full array dims
    else:
        br = max(8, (block_rows // 8) * 8)    # keep (8, 128) block divisibility
    nb = pl.cdiv(rows, br)

    out = pl.pallas_call(
        functools.partial(_focal_loss_kernel, n_valid=n, block_rows=br,
                          alpha=float(alpha), gamma=gamma),
        out_shape=jax.ShapeDtypeStruct((1, 1), jnp.float32),
        grid_spec=pltpu.PrefetchScalarGridSpec(
            num_scalar_prefetch=0,
            grid=(nb,),
            in_specs=[
                pl.BlockSpec((br, LANES), lambda i: (i, 0)),
                pl.BlockSpec((br, LANES), lambda i: (i, 0)),
            ],
            out_specs=pl.BlockSpec((1, 1), lambda i: (0, 0)),
            scratch_shapes=[pltpu.VMEM((1, LANES), jnp.float32)] * 4,
        ),
        # TODO(synk): on v7x, shard the reduction across both TensorCores via a
        # leading "parallel" grid axis with partial-accumulator outputs + a tiny
        # JAX epilogue; kept single-core sequential here for portability.
        compiler_params=pltpu.CompilerParams(dimension_semantics=("arbitrary",)),
    )(x2, t2)

    loss = out[0, 0]
    # ce is a scalar (unbatched soft-target CE), so mean/sum/none all coincide.
    return loss


def _focal_loss_ref(inputs, targets, alpha=0.25, gamma=2):
    x = inputs.reshape(-1).astype(jnp.float32)
    t = targets.reshape(-1).astype(jnp.float32)
    log_sm = x - jax.scipy.special.logsumexp(x)
    ce = -jnp.sum(t * log_sm)
    p = jnp.exp(-ce)
    return alpha * (1.0 - p) ** gamma * ce


if __name__ == "__main__":
    key = jax.random.PRNGKey(0)
    k1, k2 = jax.random.split(key)

    # NCHW-like logits; the module flattens them anyway.
    inputs = jax.random.normal(k1, (2, 4, 16, 16), dtype=jnp.float32)
    # float "probability" targets over the flattened positions (soft targets),
    # as required by F.cross_entropy for 1-D input + 1-D target.
    targets = jax.nn.softmax(
        jax.random.normal(k2, (2 * 4 * 16 * 16,), dtype=jnp.float32)
    ).reshape(2, 4, 16, 16)

    loss = focal_loss(inputs, targets, alpha=0.25, gamma=2, reduction="mean")
    loss = jax.block_until_ready(loss)

    ref = _focal_loss_ref(inputs, targets)
    assert jnp.allclose(loss, ref, rtol=1e-5, atol=1e-5), (loss, ref)

    print("KERNEL_OK")
</pallas_src>

<mosaic_0001>
module attributes {stable_mosaic.version = 11 : i64} {
  func.func @_focal_loss_kernel(%arg0: i32, %arg1: memref<16x128xf32, #tpu.memory_space<vmem>>, %arg2: memref<16x128xf32, #tpu.memory_space<vmem>>, %arg3: memref<1x1xf32, #tpu.memory_space<vmem>>, %arg4: memref<1x128xf32, #tpu.memory_space<vmem>>, %arg5: memref<1x128xf32, #tpu.memory_space<vmem>>, %arg6: memref<1x128xf32, #tpu.memory_space<vmem>>, %arg7: memref<1x128xf32, #tpu.memory_space<vmem>>) attributes {dimension_semantics = [#tpu.dimension_semantics<arbitrary>], iteration_bounds = array<i64: 1>, scalar_prefetch = 0 : i64, scratch_operands = 4 : i64, tpu.core_type = #tpu.core_type<tc>, window_params = [{transform_indices = @transform_0, window_bounds = array<i64: 16, 128>}, {transform_indices = @transform_1, window_bounds = array<i64: 16, 128>}, {pipeline_mode = #tpu.pipeline_mode<synchronous>, transform_indices = @transform_2, window_bounds = array<i64: 1, 1>}]} {
    %c0_i32 = arith.constant 0 : i32
    %0 = arith.cmpi eq, %arg0, %c0_i32 : i32
    %1 = arith.extui %0 : i1 to i32
    %c0_i32_0 = arith.constant 0 : i32
    %2 = arith.cmpi ne, %1, %c0_i32_0 : i32
    scf.if %2 {
      %cst = arith.constant -1.000000e+30 : f32
      %11 = vector.broadcast %cst : f32 to vector<1x128xf32>
      %c0_8 = arith.constant 0 : index
      %c0_9 = arith.constant 0 : index
      %12 = vector.load %arg4[%c0_8, %c0_9] : memref<1x128xf32, #tpu.memory_space<vmem>>, vector<1x128xf32>
      tpu.vector_store %arg4[%c0_8, %c0_9], %11 {strides = array<i32>} : memref<1x128xf32, #tpu.memory_space<vmem>>, vector<1x128xf32>,
      %cst_10 = arith.constant 0.000000e+00 : f32
      %13 = vector.broadcast %cst_10 : f32 to vector<1x128xf32>
      %c0_11 = arith.constant 0 : index
      %c0_12 = arith.constant 0 : index
      %14 = vector.load %arg5[%c0_11, %c0_12] : memref<1x128xf32, #tpu.memory_space<vmem>>, vector<1x128xf32>
      tpu.vector_store %arg5[%c0_11, %c0_12], %13 {strides = array<i32>} : memref<1x128xf32, #tpu.memory_space<vmem>>, vector<1x128xf32>,
      %cst_13 = arith.constant 0.000000e+00 : f32
      %15 = vector.broadcast %cst_13 : f32 to vector<1x128xf32>
      %c0_14 = arith.constant 0 : index
      %c0_15 = arith.constant 0 : index
      %16 = vector.load %arg6[%c0_14, %c0_15] : memref<1x128xf32, #tpu.memory_space<vmem>>, vector<1x128xf32>
      tpu.vector_store %arg6[%c0_14, %c0_15], %15 {strides = array<i32>} : memref<1x128xf32, #tpu.memory_space<vmem>>, vector<1x128xf32>,
      %cst_16 = arith.constant 0.000000e+00 : f32
      %17 = vector.broadcast %cst_16 : f32 to vector<1x128xf32>
      %c0_17 = arith.constant 0 : index
      %c0_18 = arith.constant 0 : index
      %18 = vector.load %arg7[%c0_17, %c0_18] : memref<1x128xf32, #tpu.memory_space<vmem>>, vector<1x128xf32>
      tpu.vector_store %arg7[%c0_17, %c0_18], %17 {strides = array<i32>} : memref<1x128xf32, #tpu.memory_space<vmem>>, vector<1x128xf32>,
    } else {
    }
    %c0 = arith.constant 0 : index
    %c0_1 = arith.constant 0 : index
    %3 = vector.load %arg1[%c0, %c0_1] : memref<16x128xf32, #tpu.memory_space<vmem>>, vector<16x128xf32>
    %c0_2 = arith.constant 0 : index
    %c0_3 = arith.constant 0 : index
    %4 = vector.load %arg2[%c0_2, %c0_3] : memref<16x128xf32, #tpu.memory_space<vmem>>, vector<16x128xf32>
    %c0_i32_4 = arith.constant 0 : i32
    %5 = arith.cmpi ne, %arg0, %c0_i32_4 : i32
    %6 = arith.extui %5 : i1 to i32
    %c0_i32_5 = arith.constant 0 : i32
    %7 = arith.cmpi ne, %6, %c0_i32_5 : i32
    scf.if %7 {
      %c0_8 = arith.constant 0 : index
      %c0_9 = arith.constant 0 : index
      %11 = vector.load %arg4[%c0_8, %c0_9] : memref<1x128xf32, #tpu.memory_space<vmem>>, vector<1x128xf32>
      %cst = arith.constant dense<0xFF800000> : vector<128xf32>
      %12 = vector.multi_reduction <maximumf>, %3, %cst [0] : vector<16x128xf32> to vector<128xf32>
      %13 = vector.shape_cast %12 : vector<128xf32> to vector<1x128xf32>
      %14 = arith.maximumf %11, %13 : vector<1x128xf32>
      %15 = arith.subf %11, %14 : vector<1x128xf32>
      %16 = math.exp %15 : vector<1x128xf32>
      %c0_10 = arith.constant 0 : index
      %c0_11 = arith.constant 0 : index
      %17 = vector.load %arg5[%c0_10, %c0_11] : memref<1x128xf32, #tpu.memory_space<vmem>>, vector<1x128xf32>
      %18 = arith.mulf %17, %16 : vector<1x128xf32>
      %19 = vector.broadcast %14 : vector<1x128xf32> to vector<16x128xf32>
      %20 = arith.subf %3, %19 : vector<16x128xf32>
      %21 = math.exp %20 : vector<16x128xf32>
      %cst_12 = arith.constant dense<0.000000e+00> : vector<128xf32>
      %22 = vector.multi_reduction <add>, %21, %cst_12 [0] : vector<16x128xf32> to vector<128xf32>
      %23 = vector.shape_cast %22 : vector<128xf32> to vector<1x128xf32>
      %24 = arith.addf %18, %23 : vector<1x128xf32>
      %c0_13 = arith.constant 0 : index
      %c0_14 = arith.constant 0 : index
      %25 = vector.load %arg5[%c0_13, %c0_14] : memref<1x128xf32, #tpu.memory_space<vmem>>, vector<1x128xf32>
      tpu.vector_store %arg5[%c0_13, %c0_14], %24 {strides = array<i32>} : memref<1x128xf32, #tpu.memory_space<vmem>>, vector<1x128xf32>,
      %c0_15 = arith.constant 0 : index
      %c0_16 = arith.constant 0 : index
      %26 = vector.load %arg6[%c0_15, %c0_16] : memref<1x128xf32, #tpu.memory_space<vmem>>, vector<1x128xf32>
      %27 = arith.mulf %4, %3 : vector<16x128xf32>
      %cst_17 = arith.constant dense<0.000000e+00> : vector<128xf32>
      %28 = vector.multi_reduction <add>, %27, %cst_17 [0] : vector<16x128xf32> to vector<128xf32>
      %29 = vector.shape_cast %28 : vector<128xf32> to vector<1x128xf32>
      %30 = arith.addf %26, %29 : vector<1x128xf32>
      %c0_18 = arith.constant 0 : index
      %c0_19 = arith.constant 0 : index
      %31 = vector.load %arg6[%c0_18, %c0_19] : memref<1x128xf32, #tpu.memory_space<vmem>>, vector<1x128xf32>
      tpu.vector_store %arg6[%c0_18, %c0_19], %30 {strides = array<i32>} : memref<1x128xf32, #tpu.memory_space<vmem>>, vector<1x128xf32>,
      %c0_20 = arith.constant 0 : index
      %c0_21 = arith.constant 0 : index
      %32 = vector.load %arg7[%c0_20, %c0_21] : memref<1x128xf32, #tpu.memory_space<vmem>>, vector<1x128xf32>
      %cst_22 = arith.constant dense<0.000000e+00> : vector<128xf32>
      %33 = vector.multi_reduction <add>, %4, %cst_22 [0] : vector<16x128xf32> to vector<128xf32>
      %34 = vector.shape_cast %33 : vector<128xf32> to vector<1x128xf32>
      %35 = arith.addf %32, %34 : vector<1x128xf32>
      %c0_23 = arith.constant 0 : index
      %c0_24 = arith.constant 0 : index
      %36 = vector.load %arg7[%c0_23, %c0_24] : memref<1x128xf32, #tpu.memory_space<vmem>>, vector<1x128xf32>
      tpu.vector_store %arg7[%c0_23, %c0_24], %35 {strides = array<i32>} : memref<1x128xf32, #tpu.memory_space<vmem>>, vector<1x128xf32>,
      %c0_25 = arith.constant 0 : index
      %c0_26 = arith.constant 0 : index
      %37 = vector.load %arg4[%c0_25, %c0_26] : memref<1x128xf32, #tpu.memory_space<vmem>>, vector<1x128xf32>
      tpu.vector_store %arg4[%c0_25, %c0_26], %14 {strides = array<i32>} : memref<1x128xf32, #tpu.memory_space<vmem>>, vector<1x128xf32>,
    } else {
    }
    %c0_i32_6 = arith.constant 0 : i32
    %8 = arith.cmpi eq, %arg0, %c0_i32_6 : i32
    %9 = arith.extui %8 : i1 to i32
    %c0_i32_7 = arith.constant 0 : i32
    %10 = arith.cmpi ne, %9, %c0_i32_7 : i32
    scf.if %10 {
      %11 = tpu.iota {dimensions = array<i32: 0>} : vector<16x128xi32>
      %12 = tpu.iota {dimensions = array<i32: 1>} : vector<16x128xi32>
      %c16_i32 = arith.constant 16 : i32
      %13 = arith.muli %arg0, %c16_i32 : i32
      %14 = vector.broadcast %13 : i32 to vector<16x128xi32>
      %15 = arith.addi %14, %11 : vector<16x128xi32>
      %c128_i32 = arith.constant 128 : i32
      %16 = vector.broadcast %c128_i32 : i32 to vector<16x128xi32>
      %17 = arith.muli %15, %16 : vector<16x128xi32>
      %18 = arith.addi %17, %12 : vector<16x128xi32>
      %c2048_i32 = arith.constant 2048 : i32
      %19 = vector.broadcast %c2048_i32 : i32 to vector<16x128xi32>
      %20 = arith.cmpi slt, %18, %19 : vector<16x128xi32>
      %cst = arith.constant -1.000000e+30 : f32
      %21 = vector.broadcast %cst : f32 to vector<16x128xf32>
      %22 = arith.select %20, %3, %21 : vector<16x128xi1>, vector<16x128xf32>
      %cst_8 = arith.constant 0.000000e+00 : f32
      %23 = vector.broadcast %cst_8 : f32 to vector<16x128xf32>
      %24 = arith.select %20, %4, %23 : vector<16x128xi1>, vector<16x128xf32>
      %c0_9 = arith.constant 0 : index
      %c0_10 = arith.constant 0 : index
      %25 = vector.load %arg4[%c0_9, %c0_10] : memref<1x128xf32, #tpu.memory_space<vmem>>, vector<1x128xf32>
      %cst_11 = arith.constant dense<0xFF800000> : vector<128xf32>
      %26 = vector.multi_reduction <maximumf>, %22, %cst_11 [0] : vector<16x128xf32> to vector<128xf32>
      %27 = vector.shape_cast %26 : vector<128xf32> to vector<1x128xf32>
      %28 = arith.maximumf %25, %27 : vector<1x128xf32>
      %29 = arith.subf %25, %28 : vector<1x128xf32>
      %30 = math.exp %29 : vector<1x128xf32>
      %c0_12 = arith.constant 0 : index
      %c0_13 = arith.constant 0 : index
      %31 = vector.load %arg5[%c0_12, %c0_13] : memref<1x128xf32, #tpu.memory_space<vmem>>, vector<1x128xf32>
      %32 = arith.mulf %31, %30 : vector<1x128xf32>
      %33 = vector.broadcast %28 : vector<1x128xf32> to vector<16x128xf32>
      %34 = arith.subf %22, %33 : vector<16x128xf32>
      %35 = math.exp %34 : vector<16x128xf32>
      %cst_14 = arith.constant dense<0.000000e+00> : vector<128xf32>
      %36 = vector.multi_reduction <add>, %35, %cst_14 [0] : vector<16x128xf32> to vector<128xf32>
      %37 = vector.shape_cast %36 : vector<128xf32> to vector<1x128xf32>
      %38 = arith.addf %32, %37 : vector<1x128xf32>
      %c0_15 = arith.constant 0 : index
      %c0_16 = arith.constant 0 : index
      %39 = vector.load %arg5[%c0_15, %c0_16] : memref<1x128xf32, #tpu.memory_space<vmem>>, vector<1x128xf32>
      tpu.vector_store %arg5[%c0_15, %c0_16], %38 {strides = array<i32>} : memref<1x128xf32, #tpu.memory_space<vmem>>, vector<1x128xf32>,
      %c0_17 = arith.constant 0 : index
      %c0_18 = arith.constant 0 : index
      %40 = vector.load %arg6[%c0_17, %c0_18] : memref<1x128xf32, #tpu.memory_space<vmem>>, vector<1x128xf32>
      %41 = arith.mulf %24, %22 : vector<16x128xf32>
      %cst_19 = arith.constant dense<0.000000e+00> : vector<128xf32>
      %42 = vector.multi_reduction <add>, %41, %cst_19 [0] : vector<16x128xf32> to vector<128xf32>
      %43 = vector.shape_cast %42 : vector<128xf32> to vector<1x128xf32>
      %44 = arith.addf %40, %43 : vector<1x128xf32>
      %c0_20 = arith.constant 0 : index
      %c0_21 = arith.constant 0 : index
      %45 = vector.load %arg6[%c0_20, %c0_21] : memref<1x128xf32, #tpu.memory_space<vmem>>, vector<1x128xf32>
      tpu.vector_store %arg6[%c0_20, %c0_21], %44 {strides = array<i32>} : memref<1x128xf32, #tpu.memory_space<vmem>>, vector<1x128xf32>,
      %c0_22 = arith.constant 0 : index
      %c0_23 = arith.constant 0 : index
      %46 = vector.load %arg7[%c0_22, %c0_23] : memref<1x128xf32, #tpu.memory_space<vmem>>, vector<1x128xf32>
      %cst_24 = arith.constant dense<0.000000e+00> : vector<128xf32>
      %47 = vector.multi_reduction <add>, %24, %cst_24 [0] : vector<16x128xf32> to vector<128xf32>
      %48 = vector.shape_cast %47 : vector<128xf32> to vector<1x128xf32>
      %49 = arith.addf %46, %48 : vector<1x128xf32>
      %c0_25 = arith.constant 0 : index
      %c0_26 = arith.constant 0 : index
      %50 = vector.load %arg7[%c0_25, %c0_26] : memref<1x128xf32, #tpu.memory_space<vmem>>, vector<1x128xf32>
      tpu.vector_store %arg7[%c0_25, %c0_26], %49 {strides = array<i32>} : memref<1x128xf32, #tpu.memory_space<vmem>>, vector<1x128xf32>,
      %c0_27 = arith.constant 0 : index
      %c0_28 = arith.constant 0 : index
      %51 = vector.load %arg4[%c0_27, %c0_28] : memref<1x128xf32, #tpu.memory_space<vmem>>, vector<1x128xf32>
      tpu.vector_store %arg4[%c0_27, %c0_28], %28 {strides = array<i32>} : memref<1x128xf32, #tpu.memory_space<vmem>>, vector<1x128xf32>,
      %c0_29 = arith.constant 0 : index
      %c0_30 = arith.constant 0 : index
      %52 = vector.load %arg4[%c0_29, %c0_30] : memref<1x128xf32, #tpu.memory_space<vmem>>, vector<1x128xf32>
      %cst_31 = arith.constant dense<0xFF800000> : vector<1xf32>
      %53 = vector.multi_reduction <maximumf>, %52, %cst_31 [1] : vector<1x128xf32> to vector<1xf32>
      %54 = vector.shape_cast %53 : vector<1xf32> to vector<1x1xf32>
      %c0_32 = arith.constant 0 : index
      %c0_33 = arith.constant 0 : index
      %55 = vector.load %arg5[%c0_32, %c0_33] : memref<1x128xf32, #tpu.memory_space<vmem>>, vector<1x128xf32>
      %56 = vector.broadcast %54 : vector<1x1xf32> to vector<1x128xf32>
      %57 = arith.subf %52, %56 : vector<1x128xf32>
      %58 = math.exp %57 : vector<1x128xf32>
      %59 = arith.mulf %55, %58 : vector<1x128xf32>
      %cst_34 = arith.constant dense<0.000000e+00> : vector<1xf32>
      %60 = vector.multi_reduction <add>, %59, %cst_34 [1] : vector<1x128xf32> to vector<1xf32>
      %61 = vector.shape_cast %60 : vector<1xf32> to vector<1x1xf32>
      %62 = math.log %61 : vector<1x1xf32>
      %63 = arith.addf %54, %62 : vector<1x1xf32>
      %c0_35 = arith.constant 0 : index
      %c0_36 = arith.constant 0 : index
      %64 = vector.load %arg7[%c0_35, %c0_36] : memref<1x128xf32, #tpu.memory_space<vmem>>, vector<1x128xf32>
      %cst_37 = arith.constant dense<0.000000e+00> : vector<1xf32>
      %65 = vector.multi_reduction <add>, %64, %cst_37 [1] : vector<1x128xf32> to vector<1xf32>
      %66 = vector.shape_cast %65 : vector<1xf32> to vector<1x1xf32>
      %67 = arith.mulf %63, %66 : vector<1x1xf32>
      %c0_38 = arith.constant 0 : index
      %c0_39 = arith.constant 0 : index
      %68 = vector.load %arg6[%c0_38, %c0_39] : memref<1x128xf32, #tpu.memory_space<vmem>>, vector<1x128xf32>
      %cst_40 = arith.constant dense<0.000000e+00> : vector<1xf32>
      %69 = vector.multi_reduction <add>, %68, %cst_40 [1] : vector<1x128xf32> to vector<1xf32>
      %70 = vector.shape_cast %69 : vector<1xf32> to vector<1x1xf32>
      %71 = arith.subf %67, %70 : vector<1x1xf32>
      %cst_41 = arith.constant 0.000000e+00 : f32
      %72 = vector.broadcast %cst_41 : f32 to vector<1x1xf32>
      %73 = arith.subf %72, %71 : vector<1x1xf32>
      %74 = math.exp %73 : vector<1x1xf32>
      %cst_42 = arith.constant 1.000000e+00 : f32
      %75 = vector.broadcast %cst_42 : f32 to vector<1x1xf32>
      %76 = arith.subf %75, %74 : vector<1x1xf32>
      %77 = arith.mulf %76, %76 : vector<1x1xf32>
      %cst_43 = arith.constant 2.500000e-01 : f32
      %78 = vector.broadcast %cst_43 : f32 to vector<1x1xf32>
      %79 = arith.mulf %78, %77 : vector<1x1xf32>
      %80 = arith.mulf %79, %71 : vector<1x1xf32>
      %c0_44 = arith.constant 0 : index
      %c0_45 = arith.constant 0 : index
      %81 = vector.load %arg3[%c0_44, %c0_45] : memref<1x1xf32, #tpu.memory_space<vmem>>, vector<1x1xf32>
      tpu.vector_store %arg3[%c0_44, %c0_45], %80 {strides = array<i32>} : memref<1x1xf32, #tpu.memory_space<vmem>>, vector<1x1xf32>,
    } else {
    }
    return
  }
  func.func @transform_0(%arg0: i32) -> (i32, i32) {
    %c0_i32 = arith.constant 0 : i32
    %c0_i32_0 = arith.constant 0 : i32
    return %arg0, %c0_i32 : i32, i32
  }
  func.func @transform_1(%arg0: i32) -> (i32, i32) {
    %c0_i32 = arith.constant 0 : i32
    %c0_i32_0 = arith.constant 0 : i32
    return %arg0, %c0_i32 : i32, i32
  }
  func.func @transform_2(%arg0: i32) -> (i32, i32) {
    %c0_i32 = arith.constant 0 : i32
    %c0_i32_0 = arith.constant 0 : i32
    %c0_i32_1 = arith.constant 0 : i32
    return %c0_i32, %c0_i32_0 : i32, i32
  }
}

</mosaic_0001>

<llo_original>
// kernel: tpu_custom_call.1
$region0: #{tpu_custom_call.1}
  #allocation0 [shape = 'u32[]', space=smem, size = 0x4, offset = 0x4, fixed_abs, tag = 'smem constant byte address 0x4 - core index']
  #allocation1 [shape = 'u32[72,128]{1,0:T(1,128)}', space=vmem, size = 0x9000, scoped, tag = 'internal scratch']
  #allocation2 [shape = 'f32[1,128]{1,0:T(1,128)}', space=vmem, size = 0x200, scoped, tag = 'scratch operand']
  #allocation3 [shape = 'f32[1,128]{1,0:T(1,128)}', space=vmem, size = 0x200, scoped, tag = 'scratch operand']
  #allocation4 [shape = 'f32[1,128]{1,0:T(1,128)}', space=vmem, size = 0x200, scoped, tag = 'scratch operand']
  #allocation5 [shape = 'f32[1,128]{1,0:T(1,128)}', space=vmem, size = 0x200, scoped, tag = 'scratch operand']
  %s0 = inlined_call_operand.hbm [shape: f32[16,128], index: 0, kind: input, shape index: {}]
  %s1 = inlined_call_operand.hbm [shape: f32[16,128], index: 1, kind: input, shape index: {}]
  %s2 = inlined_call_operand.hbm [shape: f32[1,1], index: 2, kind: output, shape index: {}]
  %s3 = sld [smem:[#allocation0]]
  $region38: #{tpu_custom_call.1} parent=0
    _
  %s5 = ssub.s32 1, %s3
  %s6 = scalar_select 0, %s5, %s3
  $region1: #{tpu_custom_call.1} parent=0
    #allocation6 [shape = 'u8[8192]{0}', space=vmem, size = 0x2000, scoped, tag = 'input window, operand 0, single buffered']
    #allocation7 [shape = 's32[1]{0}', space=sflag, size = 0x4, scoped, tag = 'scoped memory for tpu_custom_call.1']
    #allocation8 [shape = 's32[1]{0}', space=sflag, size = 0x4, scoped, tag = 'scoped memory for tpu_custom_call.1']
    #allocation9 [shape = 'u8[8192]{0}', space=vmem, size = 0x2000, scoped, tag = 'input window, operand 1, single buffered']
    #allocation10 [shape = 's32[1]{0}', space=sflag, size = 0x4, scoped, tag = 'scoped memory for tpu_custom_call.1']
    #allocation11 [shape = 'u8[512]{0}', space=vmem, size = 0x400, scoped, tag = 'output window, operand 0, single buffered']
    %7 = vsyncpa [#allocation7], 0
    %8 = vsyncpa [#allocation10], 0
    %9 = vsyncpa [#allocation8], 0
    // Predicated region
    $region2: #{tpu_custom_call.1} parent=1 // pred_check
      _
    $region3: #{tpu_custom_call.1} parent=1 // pred_check_branch
      %11 = sbr.rel (0) target = $region5
    $region4: #{tpu_custom_call.1} parent=1 // pred_region
      %13 = vsyncadd [#allocation7], 0
      %s14 = sshll.u32 %s0, 4
      %s15 = int_to_ptr.hbm [resolvable:$true] %s14
      %s16 = sshll.u32 [#allocation6], 4
      %s17 = int_to_ptr.vmem [resolvable:$true] %s16
      %22 = dma.hbm_to_vmem [thread:$0]  %s15, 256, %s17, [#allocation7], 128, 128, 8
    $region5: #{tpu_custom_call.1} parent=1 // pred_fallthru
      _
    // Predicated region
    $region6: #{tpu_custom_call.1} parent=1 // pred_check
      _
    $region7: #{tpu_custom_call.1} parent=1 // pred_check_branch
      %24 = sbr.rel (0) target = $region9
    $region8: #{tpu_custom_call.1} parent=1 // pred_region
      %26 = vsyncadd [#allocation10], 0
      %s27 = sshll.u32 %s1, 4
      %s28 = int_to_ptr.hbm [resolvable:$true] %s27
      %s29 = sshll.u32 [#allocation9], 4
      %s30 = int_to_ptr.vmem [resolvable:$true] %s29
      %35 = dma.hbm_to_vmem [thread:$0]  %s28, 256, %s30, [#allocation10], 128, 128, 8
    $region9: #{tpu_custom_call.1} parent=1 // pred_fallthru
      _
    // Predicated region
    $region10: #{tpu_custom_call.1} parent=1 // pred_check
      _
    $region11: #{tpu_custom_call.1} parent=1 // pred_check_branch
      %37 = sbr.rel (0) target = $region13
    $region12: #{tpu_custom_call.1} parent=1 // pred_region
      %39 = dma.done [#allocation7], 256
    $region13: #{tpu_custom_call.1} parent=1 // pred_fallthru
      _
    // Predicated region
    $region14: #{tpu_custom_call.1} parent=1 // pred_check
      _
    $region15: #{tpu_custom_call.1} parent=1 // pred_check_branch
      %41 = sbr.rel (0) target = $region17
    $region16: #{tpu_custom_call.1} parent=1 // pred_region
      %43 = dma.done [#allocation10], 256
    $region17: #{tpu_custom_call.1} parent=1 // pred_fallthru
      _
    %p44 = scmp.eq.s32.totalorder 0, 0
    // Predicated region
    $region18: #{tpu_custom_call.1} parent=1 // pred_check
      %p45 = pneg %p44
    $region19: #{tpu_custom_call.1} parent=1 // pred_check_branch
      %47 = sbr.rel (%p45) target = $region21
    $region20: #{tpu_custom_call.1} parent=1 // pred_region
      %48 = vst [vmem:[#allocation2] sm:$0x1] -1e+30
      %49 = vst [vmem:[#allocation3] sm:$0x1] 0.0
      %50 = vst [vmem:[#allocation4] sm:$0x1] 0.0
      %51 = vst [vmem:[#allocation5] sm:$0x1] 0.0
    $region21: #{tpu_custom_call.1} parent=1 // pred_fallthru
      _
    %v52 = vld [vmem:[#allocation6] sm:$0xff]
    %v53 = vld [vmem:[#allocation6 + $0x8] sm:$0xff]
    %v54 = vld [vmem:[#allocation9] sm:$0xff]
    %v55 = vld [vmem:[#allocation9 + $0x8] sm:$0xff]
    %p56 = scmp.ne.s32.totalorder 0, 0
    // Predicated region
    $region22: #{tpu_custom_call.1} parent=1 // pred_check
      %p57 = pneg %p56
    $region23: #{tpu_custom_call.1} parent=1 // pred_check_branch
      %59 = sbr.rel (%p57) target = $region25
    $region24: #{tpu_custom_call.1} parent=1 // pred_region
      %v60 = vld [vmem:[#allocation2] sm:$0x1]
      %v61 = vmax.f32 %v52, %v53
      %v62 = vrot.slane %v61, 4
      %v63 = vmax.f32 %v61, %v62
      %v64 = vrot.slane %v63, 2
      %v65 = vmax.f32 %v63, %v64
      %v66 = vrot.slane %v65, 1
      %v67 = vmax.f32 %v65, %v66
      %v68 = vmax.f32 %v60, %v67
      %v69 = vsub.f32 %v60, %v68
      %v70 = vmul.f32 %v69, 1.442695
      %v71 = vpow.pop %v70
      %v72 = vld [vmem:[#allocation3] sm:$0x1]
      %v73 = vmul.f32 %v72, %v71
      %v75 = vperm.slane %v68, 0
      %v77 = vsub.f32 %v52, %v75
      %v78 = vsub.f32 %v53, %v75
      %v79 = vmul.f32 %v77, 1.442695
      %v80 = vpow.pop %v79
      %v81 = vmul.f32 %v78, 1.442695
      %v82 = vpow.pop %v81
      %v83 = vadd.f32 %v80, %v82
      %v84 = vrot.slane %v83, 4
      %v85 = vadd.f32 %v83, %v84
      %v86 = vrot.slane %v85, 2
      %v87 = vadd.f32 %v85, %v86
      %v88 = vrot.slane %v87, 1
      %v89 = vadd.f32 %v87, %v88
      %v90 = vadd.f32 %v73, %v89
      %91 = vst [vmem:[#allocation3] sm:$0x1] %v90
      %v92 = vld [vmem:[#allocation4] sm:$0x1]
      %v93 = vmul.f32 %v54, %v52
      %v94 = vmul.f32 %v55, %v53
      %v95 = vadd.f32 %v93, %v94
      %v96 = vrot.slane %v95, 4
      %v97 = vadd.f32 %v95, %v96
      %v98 = vrot.slane %v97, 2
      %v99 = vadd.f32 %v97, %v98
      %v100 = vrot.slane %v99, 1
      %v101 = vadd.f32 %v99, %v100
      %v102 = vadd.f32 %v92, %v101
      %103 = vst [vmem:[#allocation4] sm:$0x1] %v102
      %v104 = vld [vmem:[#allocation5] sm:$0x1]
      %v105 = vadd.f32 %v54, %v55
      %v106 = vrot.slane %v105, 4
      %v107 = vadd.f32 %v105, %v106
      %v108 = vrot.slane %v107, 2
      %v109 = vadd.f32 %v107, %v108
      %v110 = vrot.slane %v109, 1
      %v111 = vadd.f32 %v109, %v110
      %v112 = vadd.f32 %v104, %v111
      %113 = vst [vmem:[#allocation5] sm:$0x1] %v112
      %114 = vst [vmem:[#allocation2] sm:$0x1] %v68
    $region25: #{tpu_custom_call.1} parent=1 // pred_fallthru
      _
    // Predicated region
    $region26: #{tpu_custom_call.1} parent=1 // pred_check
      %p115 = pneg %p44
    $region27: #{tpu_custom_call.1} parent=1 // pred_check_branch
      %117 = sbr.rel (%p115) target = $region29
    $region28: #{tpu_custom_call.1} parent=1 // pred_region
      %v118 = vlaneseq
      %v119 = vshrl.u32 %v118, 7
      %v120 = vadd.s32 %v119, 8
      %v121 = vlaneseq
      %v122 = vand.u32 %v121, 127
      %s123 = smul.u32 0, 16
      %v124 = vstv %s123
      %v125 = vadd.s32 %v124, %v119
      %v126 = vadd.s32 %v124, %v120
      %v127 = vmul.u32 %v125, 128
      %v128 = vmul.u32 %v126, 128
      %v129 = vadd.s32 %v127, %v122
      %v130 = vadd.s32 %v128, %v122
      %vm131 = vcmp.lt.s32.totalorder %v129, 2048
      %vm132 = vcmp.lt.s32.totalorder %v130, 2048
      %v133 = vsel %vm131, %v52, -1e+30
      %v134 = vsel %vm132, %v53, -1e+30
      %v135 = vsel %vm131, %v54, 0.0
      %v136 = vsel %vm132, %v55, 0.0
      %v137 = vld [vmem:[#allocation2] sm:$0x1]
      %v138 = vmax.f32 %v133, %v134
      %v139 = vrot.slane %v138, 4
      %v140 = vmax.f32 %v138, %v139
      %v141 = vrot.slane %v140, 2
      %v142 = vmax.f32 %v140, %v141
      %v143 = vrot.slane %v142, 1
      %v144 = vmax.f32 %v142, %v143
      %v145 = vmax.f32 %v137, %v144
      %v146 = vsub.f32 %v137, %v145
      %v147 = vmul.f32 %v146, 1.442695
      %v148 = vpow.pop %v147
      %v149 = vld [vmem:[#allocation3] sm:$0x1]
      %v150 = vmul.f32 %v149, %v148
      %v152 = vperm.slane %v145, 0
      %v154 = vsub.f32 %v133, %v152
      %v155 = vsub.f32 %v134, %v152
      %v156 = vmul.f32 %v154, 1.442695
      %v157 = vpow.pop %v156
      %v158 = vmul.f32 %v155, 1.442695
      %v159 = vpow.pop %v158
      %v160 = vadd.f32 %v157, %v159
      %v161 = vrot.slane %v160, 4
      %v162 = vadd.f32 %v160, %v161
      %v163 = vrot.slane %v162, 2
      %v164 = vadd.f32 %v162, %v163
      %v165 = vrot.slane %v164, 1
      %v166 = vadd.f32 %v164, %v165
      %v167 = vadd.f32 %v150, %v166
      %168 = vst [vmem:[#allocation3] sm:$0x1] %v167
      %v169 = vld [vmem:[#allocation4] sm:$0x1]
      %v170 = vmul.f32 %v135, %v133
      %v171 = vmul.f32 %v136, %v134
      %v172 = vadd.f32 %v170, %v171
      %v173 = vrot.slane %v172, 4
      %v174 = vadd.f32 %v172, %v173
      %v175 = vrot.slane %v174, 2
      %v176 = vadd.f32 %v174, %v175
      %v177 = vrot.slane %v176, 1
      %v178 = vadd.f32 %v176, %v177
      %v179 = vadd.f32 %v169, %v178
      %180 = vst [vmem:[#allocation4] sm:$0x1] %v179
      %v181 = vld [vmem:[#allocation5] sm:$0x1]
      %v182 = vadd.f32 %v135, %v136
      %v183 = vrot.slane %v182, 4
      %v184 = vadd.f32 %v182, %v183
      %v185 = vrot.slane %v184, 2
      %v186 = vadd.f32 %v184, %v185
      %v187 = vrot.slane %v186, 1
      %v188 = vadd.f32 %v186, %v187
      %v189 = vadd.f32 %v181, %v188
      %190 = vst [vmem:[#allocation5] sm:$0x1] %v189
      %191 = vst [vmem:[#allocation2] sm:$0x1] %v145
      %v192 = vld [vmem:[#allocation2] sm:$0x1]
      %vm193 = vcmask 1040384
      %v194 = vsel %vm193, %v192, -inf
      %195 = vmax.xlane.f32.xlu0 %v194
      %v196 = vpop.xlane.xlu0 %195
      %v197 = vld [vmem:[#allocation3] sm:$0x1]
      %v198 = vsub.f32 %v192, %v196
      %v199 = vmul.f32 %v198, 1.442695
      %v200 = vpow.pop %v199
      %v201 = vmul.f32 %v197, %v200
      %v202 = vsel %vm193, %v201, 0.0
      %203 = vadd.xlane.f32.xlu0 %v202
      %v204 = vpop.xlane.xlu0 %203
      %v205 = vlog2.pop %v204
      %v206 = vmul.f32 %v205, 0.6931472
      %v207 = vadd.f32 %v196, %v206
      %v208 = vld [vmem:[#allocation5] sm:$0x1]
      %v209 = vsel %vm193, %v208, 0.0
      %210 = vadd.xlane.f32.xlu0 %v209
      %v211 = vpop.xlane.xlu0 %210
      %v212 = vmul.f32 %v207, %v211
      %v213 = vld [vmem:[#allocation4] sm:$0x1]
      %v214 = vsel %vm193, %v213, 0.0
      %215 = vadd.xlane.f32.xlu0 %v214
      %v216 = vpop.xlane.xlu0 %215
      %v217 = vsub.f32 %v212, %v216
      %v218 = vsub.f32 0.0, %v217
      %v219 = vmul.f32 %v218, 1.442695
      %v220 = vpow.pop %v219
      %v221 = vsub.f32 1.0, %v220
      %v222 = vmul.f32 %v221, %v221
      %v223 = vmul.f32 %v222, 0.25
      %v224 = vmul.f32 %v223, %v217
      %vm225 = vcmask 0
      %226 = vst.msk [vmem:[#allocation11] sm:$0x1] %vm225, %v224
    $region29: #{tpu_custom_call.1} parent=1 // pred_fallthru
      _
    // Predicated region
    $region30: #{tpu_custom_call.1} parent=1 // pred_check
      _
    $region31: #{tpu_custom_call.1} parent=1 // pred_check_branch
      %228 = sbr.rel (0) target = $region33
    $region32: #{tpu_custom_call.1} parent=1 // pred_region
      %230 = vsyncadd [#allocation8], 0
      %s232 = sshll.u32 [#allocation11], 4
      %s233 = int_to_ptr.vmem [resolvable:$true] %s232
      %s234 = sshll.u32 %s2, 4
      %s235 = int_to_ptr.hbm [resolvable:$true] %s234
      %237 = dma.vmem_to_hbm [thread:$0]  %s233, 16, %s235, [#allocation8]
    $region33: #{tpu_custom_call.1} parent=1 // pred_fallthru
      _
    // Predicated region
    $region34: #{tpu_custom_call.1} parent=1 // pred_check
      _
    $region35: #{tpu_custom_call.1} parent=1 // pred_check_branch
      %239 = sbr.rel (0) target = $region37
    $region36: #{tpu_custom_call.1} parent=1 // pred_region
      %241 = dma.done [#allocation8], 16
    $region37: #{tpu_custom_call.1} parent=1 // pred_fallthru
      _
    %242 = vsyncpa [#allocation7], 1
    %243 = vsyncpa [#allocation10], 1
    %244 = vsyncpa [#allocation8], 1

</llo_original>
